<compile_context>
chip_gen: v7x
topology: tpu7x:2x2x1
jax: 0.10.0
libtpu: 0.0.40
codegen_flags: <defaults>
</compile_context>

<pallas_src>
import functools

import jax
import jax.numpy as jnp
from jax.experimental import pallas as pl
from jax.experimental.pallas import tpu as pltpu


def _round_up(x, m):
    return ((x + m - 1) // m) * m


def _tile_params(n, block_b):
    """Pick (tb, ch, n_pad) for a batch of n columns."""
    # Correctness: tb must be a multiple of 128 -> round block_b DOWN to 128.
    block_b = max(128, (int(block_b) // 128) * 128)
    n128 = _round_up(n, 128)
    tb = min(block_b, n128)
    # v7x megacore: prefer >= 2 grid steps so both TensorCores get work.
    if n128 >= 256 and tb > n128 // 2:
        tb = _round_up(n128 // 2, 128)
    n_pad = _round_up(n, tb)
    # Inner lane-chunk size: keeps per-chunk h1/h2 register-resident and the
    # chunked (1, ch) output stores unmasked (ch is a multiple of 128).
    if tb % 512 == 0:
        ch = 512
    elif tb % 256 == 0:
        ch = 256
    else:
        ch = 128
    return tb, ch, n_pad


def _make_kernel(d, h1, h2, tb, ch):
    """Build the batch-on-lanes Lyapunov kernel for one (D, tb) tile of x^T."""
    n_chunks = tb // ch

    def kernel(xt_ref, w1_ref, w2_ref, vec_ref, o_ref):
        # Shapes (all f32):
        #   xt_ref : (D,  tb)   transposed input tile (batch on lanes)
        #   w1_ref : (H1, D)    layer-1 weight (PyTorch out x in layout)
        #   w2_ref : (H2, H1)
        #   vec_ref: (Rmax, 5)  columns: [shift, b1_eff, b2, w3, b3]
        #   o_ref  : (1,  tb)   lane-dense output tile
        # Hoist loop-invariant resident params out of the chunk loop.
        shift = vec_ref[0:d, 0:1]            # (D, 1)
        b1e = vec_ref[0:h1, 1:2]             # (H1,1)  = b1 - W1 @ shift
        b2 = vec_ref[0:h2, 2:3]              # (H2,1)
        w3 = vec_ref[0:h2, 3:4]              # (H2,1)
        b3 = vec_ref[0:1, 4:5]               # (1, 1)
        w2 = w2_ref[...]                     # (H2,H1)
        w1_cols = [w1_ref[:, j:j + 1] for j in range(d)]   # D x (H1,1)

        @pl.loop(0, n_chunks)
        def _(c):
            off = pl.multiple_of(c * ch, ch)
            x = xt_ref[:, pl.ds(off, ch)]                        # (D, ch)

            # ||x - shift||_2 per column (tiny D-row sublane reduce).
            xs = x - shift
            nrm = jnp.sqrt(jnp.sum(xs * xs, axis=0, keepdims=True))   # (1, ch)

            # Layer 1: K = D (e.g. 4) -> VPU rank-1 updates, shift pre-folded
            # into b1e so we read raw x here. No MXU push for a 4-wide K.
            acc = w1_cols[0] * x[0:1, :] + b1e                   # (H1, ch)
            for j in range(1, d):
                acc = acc + w1_cols[j] * x[j:j + 1, :]
            h1v = jnp.tanh(acc)                                  # (H1, ch)

            # Layer 2: the only real contraction (H2 x H1) -> MXU.
            h2v = jnp.tanh(
                jnp.dot(w2, h1v, preferred_element_type=jnp.float32) + b2
            )                                                    # (H2, ch)

            # Output layer (out_features = 1): VPU mul + sublane reduce.
            raw = jnp.sum(h2v * w3, axis=0, keepdims=True) + b3  # (1, ch)

            o_ref[:, pl.ds(off, ch)] = (raw * raw) * nrm

    return kernel


@functools.partial(jax.jit, static_argnames=("block_b",))
def lyapunov_forward_xt(xt, origin_shift, w1, b1, w2, b2, w3, b3, *,
                        block_b=8192):
    """Lyapunov forward on pre-transposed input.

    xt : (D, N) with batch on the trailing axis (lane-friendly layout).
    Returns (1, N) float32 values v = (MLP(x - shift))^2 * ||x - shift||_2.
    """
    D, N = xt.shape
    H1 = w1.shape[0]
    H2 = w2.shape[0]
    f32 = jnp.float32

    tb, ch, n_pad = _tile_params(N, block_b)
    grid = (n_pad // tb,)

    xt = xt.astype(f32)
    if n_pad != N:
        # Padded columns compute garbage (xs = -shift) that is trimmed below;
        # finite-valued, so numerically harmless.  Do NOT drop the trim.
        xt = jnp.pad(xt, ((0, 0), (0, n_pad - N)))

    w1f = w1.astype(f32)
    w2f = w2.astype(f32)
    shift = origin_shift.astype(f32)
    # Fold origin_shift into an effective layer-1 bias:
    #   W1 (x - s) + b1 == W1 x + (b1 - W1 s).
    b1_eff = b1.astype(f32) - w1f @ shift

    # Pack all small vector params as columns of one VMEM-resident slab
    # (one DMA / one operand instead of six; columns are already in the
    # (rows, 1) sublane-major form the kernel broadcasts over lanes).
    rmax = max(D, H1, H2)
    vec = jnp.zeros((rmax, 5), f32)
    vec = vec.at[:D, 0].set(shift)
    vec = vec.at[:H1, 1].set(b1_eff)
    vec = vec.at[:H2, 2].set(b2.astype(f32))
    vec = vec.at[:H2, 3].set(w3.astype(f32).reshape(H2))
    vec = vec.at[0, 4].set(b3.astype(f32).reshape(()))

    def resident(shape):
        # Constant index_map: block is DMA'd once and stays VMEM-resident.
        return pl.BlockSpec(shape, lambda i: (0, 0))

    out = pl.pallas_call(
        _make_kernel(D, H1, H2, tb, ch),
        out_shape=jax.ShapeDtypeStruct((1, n_pad), f32),
        grid=grid,
        in_specs=[
            pl.BlockSpec((D, tb), lambda i: (0, i)),   # x^T streams over batch
            resident((H1, D)),
            resident((H2, H1)),
            resident((rmax, 5)),
        ],
        out_specs=pl.BlockSpec((1, tb), lambda i: (0, i)),
        compiler_params=pltpu.CompilerParams(
            dimension_semantics=("parallel",)),        # v7x megacore sharding
    )(xt, w1f, w2f, vec)

    return out[:, :N]


@functools.partial(jax.jit, static_argnames=("block_b",))
def lyapunov_forward(x, origin_shift, w1, b1, w2, b2, w3, b3, *, block_b=8192):
    """TorchLyapunovNetwork.forward (PyTorch parameter layouts).

    x : (B, D);  w1 : (H1, D), b1 : (H1,);  w2 : (H2, H1), b2 : (H2,);
    w3 : (1, H2), b3 : (1,);  origin_shift : (D,).
    Returns (B, 1) float32 Lyapunov values.
    """
    B = x.shape[0]
    # The only wrapper-side relayout: (B, D) -> (D, B).  Callers that already
    # hold states column-major can call lyapunov_forward_xt directly.
    row = lyapunov_forward_xt(x.T, origin_shift, w1, b1, w2, b2, w3, b3,
                              block_b=block_b)
    return row.reshape(B, 1)


def reference_forward(x, origin_shift, w1, b1, w2, b2, w3, b3):
    """Pure-JAX reference of the PyTorch forward (PyTorch weight layouts)."""
    xs = x - origin_shift[None, :]
    h1 = jnp.tanh(xs @ w1.T + b1[None, :])
    h2 = jnp.tanh(h1 @ w2.T + b2[None, :])
    raw = h2 @ w3.T + b3[None, :]
    norm = jnp.sqrt(jnp.sum(xs * xs, axis=-1, keepdims=True))
    return (raw * raw) * norm


if __name__ == "__main__":
    # x is (batch, state_dim); the MLP is state_dim -> 32 -> 32 -> 1.
    state_dim = 4
    hidden = [32, 32]

    key = jax.random.PRNGKey(0)
    k1, k2, k3, k4, k5, k6, k7, kx1, kx2 = jax.random.split(key, 9)

    # init_type='normal' (std=0.1); biases / origin_shift given small random
    # values so the bias and shift paths are exercised by the check.
    w1 = 0.1 * jax.random.normal(k1, (hidden[0], state_dim), jnp.float32)
    b1 = 0.05 * jax.random.normal(k2, (hidden[0],), jnp.float32)
    w2 = 0.1 * jax.random.normal(k3, (hidden[1], hidden[0]), jnp.float32)
    b2 = 0.05 * jax.random.normal(k4, (hidden[1],), jnp.float32)
    w3 = 0.1 * jax.random.normal(k5, (1, hidden[1]), jnp.float32)
    b3 = 0.05 * jax.random.normal(k6, (1,), jnp.float32)
    origin_shift = 0.1 * jax.random.normal(k7, (state_dim,), jnp.float32)

    # Case 1: batch=2500 -> tb=1280, grid=2 (both v7x cores), 5 inner chunks,
    #         padded tail tile.   Case 2: batch=100 -> single 128-lane tile.
    for batch, kx in ((2500, kx1), (100, kx2)):
        x = jax.random.normal(kx, (batch, state_dim), jnp.float32)
        out = jax.block_until_ready(
            lyapunov_forward(x, origin_shift, w1, b1, w2, b2, w3, b3))
        ref = reference_forward(x, origin_shift, w1, b1, w2, b2, w3, b3)
        assert out.shape == (batch, 1)
        err = float(jnp.max(jnp.abs(out - ref)))
        assert jnp.allclose(out, ref, atol=1e-5, rtol=1e-4), err

    print("KERNEL_OK")
</pallas_src>

<mosaic_0001>
module attributes {stable_mosaic.version = 11 : i64} {
  func.func @kernel(%arg0: i32, %arg1: memref<4x1280xf32, #tpu.memory_space<vmem>>, %arg2: memref<32x4xf32, #tpu.memory_space<vmem>>, %arg3: memref<32x32xf32, #tpu.memory_space<vmem>>, %arg4: memref<32x5xf32, #tpu.memory_space<vmem>>, %arg5: memref<1x1280xf32, #tpu.memory_space<vmem>>) attributes {dimension_semantics = [#tpu.dimension_semantics<parallel>], iteration_bounds = array<i64: 2>, scalar_prefetch = 0 : i64, scratch_operands = 0 : i64, tpu.core_type = #tpu.core_type<tc>, window_params = [{transform_indices = @transform_0, window_bounds = array<i64: 4, 1280>}, {pipeline_mode = #tpu.pipeline_mode<synchronous>, transform_indices = @transform_1, window_bounds = array<i64: 32, 4>}, {pipeline_mode = #tpu.pipeline_mode<synchronous>, transform_indices = @transform_2, window_bounds = array<i64: 32, 32>}, {pipeline_mode = #tpu.pipeline_mode<synchronous>, transform_indices = @transform_3, window_bounds = array<i64: 32, 5>}, {transform_indices = @transform_4, window_bounds = array<i64: 1, 1280>}]} {
    %c0 = arith.constant 0 : index
    %c0_0 = arith.constant 0 : index
    %0 = vector.load %arg4[%c0, %c0_0] : memref<32x5xf32, #tpu.memory_space<vmem>>, vector<4x1xf32>
    %c0_1 = arith.constant 0 : index
    %c1 = arith.constant 1 : index
    %1 = vector.load %arg4[%c0_1, %c1] : memref<32x5xf32, #tpu.memory_space<vmem>>, vector<32x1xf32>
    %c0_2 = arith.constant 0 : index
    %c2 = arith.constant 2 : index
    %2 = vector.load %arg4[%c0_2, %c2] : memref<32x5xf32, #tpu.memory_space<vmem>>, vector<32x1xf32>
    %c0_3 = arith.constant 0 : index
    %c3 = arith.constant 3 : index
    %3 = vector.load %arg4[%c0_3, %c3] : memref<32x5xf32, #tpu.memory_space<vmem>>, vector<32x1xf32>
    %c0_4 = arith.constant 0 : index
    %c4 = arith.constant 4 : index
    %4 = vector.load %arg4[%c0_4, %c4] : memref<32x5xf32, #tpu.memory_space<vmem>>, vector<1x1xf32>
    %c0_5 = arith.constant 0 : index
    %c0_6 = arith.constant 0 : index
    %5 = vector.load %arg3[%c0_5, %c0_6] : memref<32x32xf32, #tpu.memory_space<vmem>>, vector<32x32xf32>
    %c0_7 = arith.constant 0 : index
    %c0_8 = arith.constant 0 : index
    %6 = vector.load %arg2[%c0_7, %c0_8] : memref<32x4xf32, #tpu.memory_space<vmem>>, vector<32x1xf32>
    %c0_9 = arith.constant 0 : index
    %c1_10 = arith.constant 1 : index
    %7 = vector.load %arg2[%c0_9, %c1_10] : memref<32x4xf32, #tpu.memory_space<vmem>>, vector<32x1xf32>
    %c0_11 = arith.constant 0 : index
    %c2_12 = arith.constant 2 : index
    %8 = vector.load %arg2[%c0_11, %c2_12] : memref<32x4xf32, #tpu.memory_space<vmem>>, vector<32x1xf32>
    %c0_13 = arith.constant 0 : index
    %c3_14 = arith.constant 3 : index
    %9 = vector.load %arg2[%c0_13, %c3_14] : memref<32x4xf32, #tpu.memory_space<vmem>>, vector<32x1xf32>
    %c0_i32 = arith.constant 0 : i32
    %c5_i32 = arith.constant 5 : i32
    %10 = arith.addi %c0_i32, %c5_i32 : i32
    %c1_i32 = arith.constant 1 : i32
    scf.for %arg6 = %c0_i32 to %10 step %c1_i32  : i32 {
      %c1_i32_16 = arith.constant 1 : i32
      %11 = arith.muli %arg6, %c1_i32_16 : i32
      %c0_i32_17 = arith.constant 0 : i32
      %12 = arith.addi %c0_i32_17, %11 : i32
      %c256_i32 = arith.constant 256 : i32
      %13 = arith.muli %12, %c256_i32 : i32
      %14 = tpu.assume_multiple %13, 256 : i32
      %c0_18 = arith.constant 0 : index
      %15 = arith.index_cast %14 : i32 to index
      %16 = vector.load %arg1[%c0_18, %15] : memref<4x1280xf32, #tpu.memory_space<vmem>>, vector<4x256xf32>
      %17 = vector.broadcast %0 : vector<4x1xf32> to vector<4x256xf32>
      %18 = arith.subf %16, %17 : vector<4x256xf32>
      %19 = arith.mulf %18, %18 : vector<4x256xf32>
      %cst = arith.constant dense<0.000000e+00> : vector<256xf32>
      %20 = vector.multi_reduction <add>, %19, %cst [0] : vector<4x256xf32> to vector<256xf32>
      %21 = vector.shape_cast %20 : vector<256xf32> to vector<1x256xf32>
      %22 = math.sqrt %21 : vector<1x256xf32>
      %23 = vector.extract_strided_slice %16 {offsets = [0, 0], sizes = [1, 256], strides = [1, 1]} : vector<4x256xf32> to vector<1x256xf32>
      %24 = vector.broadcast %6 : vector<32x1xf32> to vector<32x256xf32>
      %25 = vector.broadcast %23 : vector<1x256xf32> to vector<32x256xf32>
      %26 = arith.mulf %24, %25 : vector<32x256xf32>
      %27 = vector.broadcast %1 : vector<32x1xf32> to vector<32x256xf32>
      %28 = arith.addf %26, %27 : vector<32x256xf32>
      %29 = vector.extract_strided_slice %16 {offsets = [1, 0], sizes = [1, 256], strides = [1, 1]} : vector<4x256xf32> to vector<1x256xf32>
      %30 = vector.broadcast %7 : vector<32x1xf32> to vector<32x256xf32>
      %31 = vector.broadcast %29 : vector<1x256xf32> to vector<32x256xf32>
      %32 = arith.mulf %30, %31 : vector<32x256xf32>
      %33 = arith.addf %28, %32 : vector<32x256xf32>
      %34 = vector.extract_strided_slice %16 {offsets = [2, 0], sizes = [1, 256], strides = [1, 1]} : vector<4x256xf32> to vector<1x256xf32>
      %35 = vector.broadcast %8 : vector<32x1xf32> to vector<32x256xf32>
      %36 = vector.broadcast %34 : vector<1x256xf32> to vector<32x256xf32>
      %37 = arith.mulf %35, %36 : vector<32x256xf32>
      %38 = arith.addf %33, %37 : vector<32x256xf32>
      %39 = vector.extract_strided_slice %16 {offsets = [3, 0], sizes = [1, 256], strides = [1, 1]} : vector<4x256xf32> to vector<1x256xf32>
      %40 = vector.broadcast %9 : vector<32x1xf32> to vector<32x256xf32>
      %41 = vector.broadcast %39 : vector<1x256xf32> to vector<32x256xf32>
      %42 = arith.mulf %40, %41 : vector<32x256xf32>
      %43 = arith.addf %38, %42 : vector<32x256xf32>
      %44 = math.tanh %43 : vector<32x256xf32>
      %cst_19 = arith.constant dense<0.000000e+00> : vector<32x256xf32>
      %45 = tpu.matmul %5, %44, %cst_19 {dimension_numbers = #tpu.dot_dimension_numbers<[1], [0], [0], [1], [0, 0, 1, 1], [], []>} : vector<32x32xf32>, vector<32x256xf32>, vector<32x256xf32> -> vector<32x256xf32>
      %46 = vector.broadcast %2 : vector<32x1xf32> to vector<32x256xf32>
      %47 = arith.addf %45, %46 : vector<32x256xf32>
      %48 = math.tanh %47 : vector<32x256xf32>
      %49 = vector.broadcast %3 : vector<32x1xf32> to vector<32x256xf32>
      %50 = arith.mulf %48, %49 : vector<32x256xf32>
      %cst_20 = arith.constant dense<0.000000e+00> : vector<256xf32>
      %51 = vector.multi_reduction <add>, %50, %cst_20 [0] : vector<32x256xf32> to vector<256xf32>
      %52 = vector.shape_cast %51 : vector<256xf32> to vector<1x256xf32>
      %53 = vector.broadcast %4 : vector<1x1xf32> to vector<1x256xf32>
      %54 = arith.addf %52, %53 : vector<1x256xf32>
      %55 = arith.mulf %54, %54 : vector<1x256xf32>
      %56 = arith.mulf %55, %22 : vector<1x256xf32>
      %c0_21 = arith.constant 0 : index
      %57 = arith.index_cast %14 : i32 to index
      %58 = vector.load %arg5[%c0_21, %57] : memref<1x1280xf32, #tpu.memory_space<vmem>>, vector<1x256xf32>
      tpu.vector_store %arg5[%c0_21, %57], %56 {strides = array<i32>} : memref<1x1280xf32, #tpu.memory_space<vmem>>, vector<1x256xf32>,
    }
    %c5_i32_15 = arith.constant 5 : i32
    return
  }
  func.func @transform_0(%arg0: i32) -> (i32, i32) {
    %c0_i32 = arith.constant 0 : i32
    %c0_i32_0 = arith.constant 0 : i32
    return %c0_i32, %arg0 : i32, i32
  }
  func.func @transform_1(%arg0: i32) -> (i32, i32) {
    %c0_i32 = arith.constant 0 : i32
    %c0_i32_0 = arith.constant 0 : i32
    %c0_i32_1 = arith.constant 0 : i32
    return %c0_i32, %c0_i32_0 : i32, i32
  }
  func.func @transform_2(%arg0: i32) -> (i32, i32) {
    %c0_i32 = arith.constant 0 : i32
    %c0_i32_0 = arith.constant 0 : i32
    %c0_i32_1 = arith.constant 0 : i32
    return %c0_i32, %c0_i32_0 : i32, i32
  }
  func.func @transform_3(%arg0: i32) -> (i32, i32) {
    %c0_i32 = arith.constant 0 : i32
    %c0_i32_0 = arith.constant 0 : i32
    %c0_i32_1 = arith.constant 0 : i32
    return %c0_i32, %c0_i32_0 : i32, i32
  }
  func.func @transform_4(%arg0: i32) -> (i32, i32) {
    %c0_i32 = arith.constant 0 : i32
    %c0_i32_0 = arith.constant 0 : i32
    return %c0_i32, %arg0 : i32, i32
  }
}

</mosaic_0001>

<llo_original>
// kernel: lyapunov_forward_xt.1
$region0: #{lyapunov_forward_xt.1}
  #allocation0 [shape = 'u32[]', space=smem, size = 0x4, offset = 0x4, fixed_abs, tag = 'smem constant byte address 0x4 - core index']
  #allocation1 [shape = 'u32[144,128]{1,0:T(1,128)}', space=vmem, size = 0x12000, scoped, tag = 'internal scratch']
  %s0 = inlined_call_operand.vmem [shape: f32[4,2560], index: 0, kind: input, shape index: {}]
  %s1 = inlined_call_operand.vmem [shape: f32[32,4], index: 1, kind: input, shape index: {}]
  %s2 = inlined_call_operand.vmem [shape: f32[32,32], index: 2, kind: input, shape index: {}]
  %s3 = inlined_call_operand.vmem [shape: f32[32,5], index: 3, kind: input, shape index: {}]
  %s4 = inlined_call_operand.hbm [shape: f32[1,2560], index: 4, kind: output, shape index: {}]
  %s5 = sld [smem:[#allocation0]]
  $region56: #{lyapunov_forward_xt.1} parent=0
    _
  %s7 = ssub.s32 1, %s5
  %s8 = scalar_select 0, %s7, %s5
  $region1: #{lyapunov_forward_xt.1} parent=0
    #allocation2 [shape = 'u8[10240]{0}', space=vmem, size = 0x2800, scoped, tag = 'output window, operand 0']
    #allocation3 [shape = 's32[2]{0}', space=sflag, size = 0x8, scoped, tag = 'scoped memory for lyapunov_forward_xt.1']
    %9 = vsyncpa [#allocation3], 0
    %s10 = scalar_lea.sflag [#allocation3], 1
    %11 = vsyncpa %s10, 0
    loop: start=0, step=1, limit=4
    $region2: #{lyapunov_forward_xt.1} parent=1 // loop_pre_header
      _
    $region3: #{lyapunov_forward_xt.1} parent=1 // loop_header
      %s13 = sphi 0, %s17
      %p14 = scmp.ge.s32.totalorder %s13, 4
      %s23 = sphi 0, %s25
      %s26 = sphi 0, %s23
      %s27 = sphi 0, %s26
      %s43 = sphi 0, %s27
      %s47 = sphi 0, %s47
      %s49 = sphi 0, %s47
      %s50 = sphi 0, %s49
      %s64 = sphi 0, %s50
      %s68 = sphi 0, %s68
      %s70 = sphi 0, %s68
      %s71 = sphi 0, %s70
      %s85 = sphi 0, %s71
      %s89 = sphi 0, %s89
      %s91 = sphi 0, %s89
      %s92 = sphi 0, %s91
      %s106 = sphi 0, %s92
      %s112 = sphi 0, %s114
      %s115 = sphi 0, %s112
      %s116 = sphi 0, %s115
      %s132 = sphi 0, %s116
    $region4: #{lyapunov_forward_xt.1} parent=1 // loop_header_branch
      %16 = sbr.rel (%p14) target = $region8
    $region5: #{lyapunov_forward_xt.1} parent=1 // loop_body
      %s18 = ssub.s32 %s13, 1
      %s19 = ssub.s32 %s13, 2
      %s20 = sadd.s32 %s13, 1
      %s21 = ssub.s32 %s13, %s20
      %p22 = scmp.eq.s32.totalorder %s21, 0
      %s24 = sadd.s32 %s23, 1
      %s25 = scalar_select %p22, %s23, %s24
      %p28 = pneg %p22
      %p29 = scmp.eq.s32.totalorder %s13, 1
      %p30 = por %p28, %p29
      %p31 = scmp.ne.s32.totalorder %s23, %s26
      %p32 = scmp.eq.s32.totalorder %s13, 0
      %p33 = por %p31, %p32
      %p34 = scmp.ne.s32.totalorder %s23, %s26
      %p35 = scmp.eq.s32.totalorder %s18, 1
      %p36 = por %p34, %p35
      %p37 = scmp.ne.s32.totalorder %s26, %s27
      %p38 = scmp.eq.s32.totalorder %s18, 0
      %p39 = por %p37, %p38
      %p40 = scmp.ne.s32.totalorder %s26, %s27
      %p41 = scmp.eq.s32.totalorder %s19, 1
      %p42 = por %p40, %p41
      %p44 = scmp.ne.s32.totalorder %s27, %s43
      %p45 = scmp.eq.s32.totalorder %s19, 0
      %p46 = por %p44, %p45
      %s48 = sadd.s32 %s47, 1
      %p51 = scmp.eq.s32.totalorder %s13, 1
      %p52 = scmp.ne.s32.totalorder %s47, %s49
      %p53 = scmp.eq.s32.totalorder %s13, 0
      %p54 = por %p52, %p53
      %p55 = scmp.ne.s32.totalorder %s47, %s49
      %p56 = scmp.eq.s32.totalorder %s18, 1
      %p57 = por %p55, %p56
      %p58 = scmp.ne.s32.totalorder %s49, %s50
      %p59 = scmp.eq.s32.totalorder %s18, 0
      %p60 = por %p58, %p59
      %p61 = scmp.ne.s32.totalorder %s49, %s50
      %p62 = scmp.eq.s32.totalorder %s19, 1
      %p63 = por %p61, %p62
      %p65 = scmp.ne.s32.totalorder %s50, %s64
      %p66 = scmp.eq.s32.totalorder %s19, 0
      %p67 = por %p65, %p66
      %s69 = sadd.s32 %s68, 1
      %p72 = scmp.eq.s32.totalorder %s13, 1
      %p73 = scmp.ne.s32.totalorder %s68, %s70
      %p74 = scmp.eq.s32.totalorder %s13, 0
      %p75 = por %p73, %p74
      %p76 = scmp.ne.s32.totalorder %s68, %s70
      %p77 = scmp.eq.s32.totalorder %s18, 1
      %p78 = por %p76, %p77
      %p79 = scmp.ne.s32.totalorder %s70, %s71
      %p80 = scmp.eq.s32.totalorder %s18, 0
      %p81 = por %p79, %p80
      %p82 = scmp.ne.s32.totalorder %s70, %s71
      %p83 = scmp.eq.s32.totalorder %s19, 1
      %p84 = por %p82, %p83
      %p86 = scmp.ne.s32.totalorder %s71, %s85
      %p87 = scmp.eq.s32.totalorder %s19, 0
      %p88 = por %p86, %p87
      %s90 = sadd.s32 %s89, 1
      %p93 = scmp.eq.s32.totalorder %s13, 1
      %p94 = scmp.ne.s32.totalorder %s89, %s91
      %p95 = scmp.eq.s32.totalorder %s13, 0
      %p96 = por %p94, %p95
      %p97 = scmp.ne.s32.totalorder %s89, %s91
      %p98 = scmp.eq.s32.totalorder %s18, 1
      %p99 = por %p97, %p98
      %p100 = scmp.ne.s32.totalorder %s91, %s92
      %p101 = scmp.eq.s32.totalorder %s18, 0
      %p102 = por %p100, %p101
      %p103 = scmp.ne.s32.totalorder %s91, %s92
      %p104 = scmp.eq.s32.totalorder %s19, 1
      %p105 = por %p103, %p104
      %p107 = scmp.ne.s32.totalorder %s92, %s106
      %p108 = scmp.eq.s32.totalorder %s19, 0
      %p109 = por %p107, %p108
      %s110 = ssub.s32 %s13, %s20
      %p111 = scmp.eq.s32.totalorder %s110, 0
      %s113 = sadd.s32 %s112, 1
      %s114 = scalar_select %p111, %s112, %s113
      %p117 = pneg %p111
      %p118 = scmp.eq.s32.totalorder %s13, 1
      %p119 = por %p117, %p118
      %p120 = scmp.ne.s32.totalorder %s112, %s115
      %p121 = scmp.eq.s32.totalorder %s13, 0
      %p122 = por %p120, %p121
      %p123 = scmp.ne.s32.totalorder %s112, %s115
      %p124 = scmp.eq.s32.totalorder %s18, 1
      %p125 = por %p123, %p124
      %p126 = scmp.ne.s32.totalorder %s115, %s116
      %p127 = scmp.eq.s32.totalorder %s18, 0
      %p128 = por %p126, %p127
      %p129 = scmp.ne.s32.totalorder %s115, %s116
      %p130 = scmp.eq.s32.totalorder %s19, 1
      %p131 = por %p129, %p130
      %p133 = scmp.ne.s32.totalorder %s116, %s132
      %p134 = scmp.eq.s32.totalorder %s19, 0
      %p135 = por %p133, %p134
      %p136 = scmp.le.s32.totalorder 1, %s13
      %p137 = scmp.lt.s32.totalorder %s13, 3
      %p138 = pnand %p136, %p137
      %p139 = pneg %p138
      // Predicated region
      $region9: #{lyapunov_forward_xt.1} parent=5 // pred_check
        _
      $region10: #{lyapunov_forward_xt.1} parent=5 // pred_check_branch
        %141 = sbr.rel (%p138) target = $region12
      $region11: #{lyapunov_forward_xt.1} parent=5 // pred_region
        %s142 = ssub.s32 %s13, 1
        // Predicated region
        $region13: #{lyapunov_forward_xt.1} parent=11 // pred_check
          %p143 = pneg %p60
        $region14: #{lyapunov_forward_xt.1} parent=11 // pred_check_branch
          %145 = sbr.rel (%p143) target = $region16
        $region15: #{lyapunov_forward_xt.1} parent=11 // pred_region
          _
        $region16: #{lyapunov_forward_xt.1} parent=11 // pred_fallthru
          _
        // Predicated region
        $region17: #{lyapunov_forward_xt.1} parent=11 // pred_check
          %p146 = pneg %p81
        $region18: #{lyapunov_forward_xt.1} parent=11 // pred_check_branch
          %148 = sbr.rel (%p146) target = $region20
        $region19: #{lyapunov_forward_xt.1} parent=11 // pred_region
          _
        $region20: #{lyapunov_forward_xt.1} parent=11 // pred_fallthru
          _
        // Predicated region
        $region21: #{lyapunov_forward_xt.1} parent=11 // pred_check
          %p149 = pneg %p102
        $region22: #{lyapunov_forward_xt.1} parent=11 // pred_check_branch
          %151 = sbr.rel (%p149) target = $region24
        $region23: #{lyapunov_forward_xt.1} parent=11 // pred_region
          _
        $region24: #{lyapunov_forward_xt.1} parent=11 // pred_fallthru
          _
      $region12: #{lyapunov_forward_xt.1} parent=5 // pred_fallthru
        _
      %p152 = scmp.lt.s32.totalorder %s13, 2
      // Predicated region
      $region25: #{lyapunov_forward_xt.1} parent=5 // pred_check
        %p153 = pneg %p152
      $region26: #{lyapunov_forward_xt.1} parent=5 // pred_check_branch
        %155 = sbr.rel (%p153) target = $region28
      $region27: #{lyapunov_forward_xt.1} parent=5 // pred_region
        // Predicated region
        $region29: #{lyapunov_forward_xt.1} parent=27 // pred_check
          %p156 = pneg %p33
        $region30: #{lyapunov_forward_xt.1} parent=27 // pred_check_branch
          %158 = sbr.rel (%p156) target = $region32
        $region31: #{lyapunov_forward_xt.1} parent=27 // pred_region
          %s159 = smul.u32 10, %s13
          %p160 = scmp.lt.s32.totalorder %s159, 19
          %s161 = scalar_select %p160, %s159, 19
          %s162 = smul.addr %s161, 4
          %s163 = scalar_lea.vmem %s0, %s162
          %s164 = smul.u32 10, %s13
        $region32: #{lyapunov_forward_xt.1} parent=27 // pred_fallthru
          _
      $region28: #{lyapunov_forward_xt.1} parent=5 // pred_fallthru
        _
      %p165 = scmp.le.s32.totalorder 1, %s13
      %p166 = scmp.lt.s32.totalorder %s13, 3
      %p167 = pnand %p165, %p166
      %p168 = pneg %p167
      // Predicated region
      $region33: #{lyapunov_forward_xt.1} parent=5 // pred_check
        _
      $region34: #{lyapunov_forward_xt.1} parent=5 // pred_check_branch
        %170 = sbr.rel (%p167) target = $region36
      $region35: #{lyapunov_forward_xt.1} parent=5 // pred_region
        %s171 = ssub.s32 %s13, 1
        %s172 = smul.u32 10, %s18
        %p173 = scmp.lt.s32.totalorder %s172, 19
        %s174 = scalar_select %p173, %s172, 19
        %s175 = smul.addr %s174, 4
        %s176 = scalar_lea.vmem %s0, %s175
        %p177 = pneg %p39
        %p178 = pneg %p36
        %p179 = pneg %p60
        %p180 = pneg %p57
        %p181 = pneg %p81
        %p182 = pneg %p78
        %p183 = pneg %p102
        %p184 = pneg %p99
        %p185 = pneg %p128
        %p186 = pneg %p125
        %s187 = sand.u32 %s115, 1
        %s188 = scalar_lea.sflag [#allocation3], %s187
        %s189 = sand.u32 %s115, 1
        %s190 = smul.addr %s189, 10
        %s191 = scalar_lea.vmem [#allocation2], %s190
        %s192 = smul.u32 10, %s18
        %p193 = scmp.lt.s32.totalorder %s192, 19
        %s194 = scalar_select %p193, %s192, 19
        %s195 = smul.addr %s194, 4
        %s196 = scalar_lea.vmem %s0, %s195
        %s197 = smul.u32 10, %s18
        %s198 = smul.u32 10, %s18
        %v199 = vld [vmem:[%s3] sm:$0xf]
        %v200 = vld [vmem:[%s3] sm:$0xff]
        %v201 = vld [vmem:[%s3 + $0x8] sm:$0xff]
        %v202 = vld [vmem:[%s3 + $0x10] sm:$0xff]
        %v203 = vld [vmem:[%s3 + $0x18] sm:$0xff]
        %v204 = vld [vmem:[%s3] sm:$0x1]
        %v205 = vld [vmem:[%s2] sm:$0xff]
        %v206 = vld [vmem:[%s2 + $0x8] sm:$0xff]
        %v207 = vld [vmem:[%s2 + $0x10] sm:$0xff]
        %v208 = vld [vmem:[%s2 + $0x18] sm:$0xff]
        %v209 = vld [vmem:[%s1] sm:$0xff]
        %v210 = vld [vmem:[%s1 + $0x8] sm:$0xff]
        %v211 = vld [vmem:[%s1 + $0x10] sm:$0xff]
        %v212 = vld [vmem:[%s1 + $0x18] sm:$0xff]
        loop: start=0, step=1, limit=5
        $region37: #{lyapunov_forward_xt.1} parent=35 // loop_pre_header
          _
        $region38: #{lyapunov_forward_xt.1} parent=35 // loop_header
          %s214 = sphi 0, %s218
          %p215 = scmp.ge.s32.totalorder %s214, 5
        $region39: #{lyapunov_forward_xt.1} parent=35 // loop_header_branch
          %217 = sbr.rel (%p215) target = $region43
        $region40: #{lyapunov_forward_xt.1} parent=35 // loop_body
          %s219 = smul.u32 %s214, 256
          %s220 = sshra.s32 %s219, 7
          %s221 = sand.u32 %s219, 127
          %s222 = smul.addr %s220, 4
          %s223 = scalar_lea.vmem %s196, %s222
          %v224 = vld [vmem:[%s223] sm:$0xff]
          %226 = vset.pattern.permute.xlu0 0
          %227 = vperm.xlu0 %226, %v199
          %v228 = vpop.permute.xlu0 %227
          %v230 = vunpack.c.l.s4 839922192
          %v231 = vunpack.c.0.s8 %v230
          %v232 = vlaneseq
          %v233 = vshrl.u32 %v232, 7
          %v234 = vsub.s32 %v231, %v233
          %v235 = vrot.slane %v228, %v234
          %v237 = vsub.f32 %v224, %v235
          %v238 = vmul.f32 %v237, %v237
          %v240 = vcombine.high %v238, %v238
          %vm242 = vcmask 1043456
          %v243 = vsel %vm242, %v238, 0.0
          %v244 = vrot.slane %v243, 4
          %v245 = vadd.f32 %v243, %v244
          %v246 = vrot.slane %v245, 2
          %v247 = vadd.f32 %v245, %v246
          %v248 = vrot.slane %v247, 1
          %v249 = vadd.f32 %v247, %v248
          %v250 = vsel %vm242, %v240, 0.0
          %v251 = vrot.slane %v250, 4
          %v252 = vadd.f32 %v250, %v251
          %v253 = vrot.slane %v252, 2
          %v254 = vadd.f32 %v252, %v253
          %v255 = vrot.slane %v254, 1
          %v256 = vadd.f32 %v254, %v255
          %v257 = vrsqrt.pop %v249
          %v258 = vmul.f32 %v249, %v257
          %vm259 = vcmp.eq.f32.partialorder %v249, inf
          %v260 = vsel %vm259, %v249, %v258
          %vm261 = vcmp.eq.f32.partialorder %v249, 0.0
          %v262 = vand.u32 %v249, 2147483648
          %v263 = vsel %vm261, %v262, %v260
          %v264 = vrsqrt.pop %v256
          %v265 = vmul.f32 %v256, %v264
          %vm266 = vcmp.eq.f32.partialorder %v256, inf
          %v267 = vsel %vm266, %v256, %v265
          %vm268 = vcmp.eq.f32.partialorder %v256, 0.0
          %v269 = vand.u32 %v256, 2147483648
          %v270 = vsel %vm268, %v269, %v267
          %272 = vset.pattern.permute.xlu0 0
          %273 = vperm.xlu0 %272, %v209
          %v274 = vpop.permute.xlu0 %273
          %277 = vset.pattern.permute.xlu0 0
          %278 = vperm.xlu0 %277, %v210
          %v279 = vpop.permute.xlu0 %278
          %282 = vset.pattern.permute.xlu0 0
          %283 = vperm.xlu0 %282, %v211
          %v284 = vpop.permute.xlu0 %283
          %287 = vset.pattern.permute.xlu0 0
          %288 = vperm.xlu0 %287, %v212
          %v289 = vpop.permute.xlu0 %288
          %v292 = vlaneseq
          %v293 = vshrl.u32 %v292, 7
          %v294 = vsub.s32 0, %v293
          %v295 = vrot.slane %v224, %v294
          %v296 = vlaneseq
          %v297 = vshrl.u32 %v296, 7
          %v298 = vsub.s32 4, %v297
          %v299 = vrot.slane %v224, %v298
          %v302 = vlaneseq
          %v303 = vshrl.u32 %v302, 7
          %v304 = vsub.s32 0, %v303
          %v305 = vrot.slane %v295, %v304
          %v306 = vlaneseq
          %v307 = vshrl.u32 %v306, 7
          %v308 = vsub.s32 0, %v307
          %v309 = vrot.slane %v299, %v308
          %v310 = vmul.f32 %v274, %v305
          %v311 = vmul.f32 %v274, %v309
          %v312 = vmul.f32 %v279, %v305
          %v313 = vmul.f32 %v279, %v309
          %v314 = vmul.f32 %v284, %v305
          %v315 = vmul.f32 %v284, %v309
          %v316 = vmul.f32 %v289, %v305
          %v317 = vmul.f32 %v289, %v309
          %319 = vset.pattern.permute.xlu0 1
          %320 = vperm.xlu0 %319, %v200
          %v321 = vpop.permute.xlu0 %320
          %324 = vset.pattern.permute.xlu0 1
          %325 = vperm.xlu0 %324, %v201
          %v326 = vpop.permute.xlu0 %325
          %329 = vset.pattern.permute.xlu0 1
          %330 = vperm.xlu0 %329, %v202
          %v331 = vpop.permute.xlu0 %330
          %334 = vset.pattern.permute.xlu0 1
          %335 = vperm.xlu0 %334, %v203
          %v336 = vpop.permute.xlu0 %335
          %v338 = vadd.f32 %v310, %v321
          %v339 = vadd.f32 %v311, %v321
          %v340 = vadd.f32 %v312, %v326
          %v341 = vadd.f32 %v313, %v326
          %v342 = vadd.f32 %v314, %v331
          %v343 = vadd.f32 %v315, %v331
          %v344 = vadd.f32 %v316, %v336
          %v345 = vadd.f32 %v317, %v336
          %346 = vset.pattern.permute.xlu0 1
          %347 = vperm.xlu0 %346, %v209
          %v348 = vpop.permute.xlu0 %347
          %350 = vset.pattern.permute.xlu0 1
          %351 = vperm.xlu0 %350, %v210
          %v352 = vpop.permute.xlu0 %351
          %354 = vset.pattern.permute.xlu0 1
          %355 = vperm.xlu0 %354, %v211
          %v356 = vpop.permute.xlu0 %355
          %358 = vset.pattern.permute.xlu0 1
          %359 = vperm.xlu0 %358, %v212
          %v360 = vpop.permute.xlu0 %359
          %v362 = vlaneseq
          %v363 = vshrl.u32 %v362, 7
          %v364 = vsub.s32 1, %v363
          %v365 = vrot.slane %v224, %v364
          %v366 = vlaneseq
          %v367 = vshrl.u32 %v366, 7
          %v368 = vsub.s32 5, %v367
          %v369 = vrot.slane %v224, %v368
          %v372 = vlaneseq
          %v373 = vshrl.u32 %v372, 7
          %v374 = vsub.s32 1, %v373
          %v375 = vrot.slane %v365, %v374
          %v376 = vlaneseq
          %v377 = vshrl.u32 %v376, 7
          %v378 = vsub.s32 1, %v377
          %v379 = vrot.slane %v369, %v378
          %v380 = vmul.f32 %v348, %v375
          %v381 = vmul.f32 %v348, %v379
          %v382 = vmul.f32 %v352, %v375
          %v383 = vmul.f32 %v352, %v379
          %v384 = vmul.f32 %v356, %v375
          %v385 = vmul.f32 %v356, %v379
          %v386 = vmul.f32 %v360, %v375
          %v387 = vmul.f32 %v360, %v379
          %v388 = vadd.f32 %v338, %v380
          %v389 = vadd.f32 %v339, %v381
          %v390 = vadd.f32 %v340, %v382
          %v391 = vadd.f32 %v341, %v383
          %v392 = vadd.f32 %v342, %v384
          %v393 = vadd.f32 %v343, %v385
          %v394 = vadd.f32 %v344, %v386
          %v395 = vadd.f32 %v345, %v387
          %396 = vset.pattern.permute.xlu0 2
          %397 = vperm.xlu0 %396, %v209
          %v398 = vpop.permute.xlu0 %397
          %400 = vset.pattern.permute.xlu0 2
          %401 = vperm.xlu0 %400, %v210
          %v402 = vpop.permute.xlu0 %401
          %404 = vset.pattern.permute.xlu0 2
          %405 = vperm.xlu0 %404, %v211
          %v406 = vpop.permute.xlu0 %405
          %408 = vset.pattern.permute.xlu0 2
          %409 = vperm.xlu0 %408, %v212
          %v410 = vpop.permute.xlu0 %409
          %v412 = vlaneseq
          %v413 = vshrl.u32 %v412, 7
          %v414 = vsub.s32 2, %v413
          %v415 = vrot.slane %v224, %v414
          %v416 = vlaneseq
          %v417 = vshrl.u32 %v416, 7
          %v418 = vsub.s32 6, %v417
          %v419 = vrot.slane %v224, %v418
          %v422 = vlaneseq
          %v423 = vshrl.u32 %v422, 7
          %v424 = vsub.s32 2, %v423
          %v425 = vrot.slane %v415, %v424
          %v426 = vlaneseq
          %v427 = vshrl.u32 %v426, 7
          %v428 = vsub.s32 2, %v427
          %v429 = vrot.slane %v419, %v428
          %v430 = vmul.f32 %v398, %v425
          %v431 = vmul.f32 %v398, %v429
          %v432 = vmul.f32 %v402, %v425
          %v433 = vmul.f32 %v402, %v429
          %v434 = vmul.f32 %v406, %v425
          %v435 = vmul.f32 %v406, %v429
          %v436 = vmul.f32 %v410, %v425
          %v437 = vmul.f32 %v410, %v429
          %v438 = vadd.f32 %v388, %v430
          %v439 = vadd.f32 %v389, %v431
          %v440 = vadd.f32 %v390, %v432
          %v441 = vadd.f32 %v391, %v433
          %v442 = vadd.f32 %v392, %v434
          %v443 = vadd.f32 %v393, %v435
          %v444 = vadd.f32 %v394, %v436
          %v445 = vadd.f32 %v395, %v437
          %446 = vset.pattern.permute.xlu0 3
          %447 = vperm.xlu0 %446, %v209
          %v448 = vpop.permute.xlu0 %447
          %450 = vset.pattern.permute.xlu0 3
          %451 = vperm.xlu0 %450, %v210
          %v452 = vpop.permute.xlu0 %451
          %454 = vset.pattern.permute.xlu0 3
          %455 = vperm.xlu0 %454, %v211
          %v456 = vpop.permute.xlu0 %455
          %458 = vset.pattern.permute.xlu0 3
          %459 = vperm.xlu0 %458, %v212
          %v460 = vpop.permute.xlu0 %459
          %v462 = vlaneseq
          %v463 = vshrl.u32 %v462, 7
          %v464 = vsub.s32 3, %v463
          %v465 = vrot.slane %v224, %v464
          %v466 = vlaneseq
          %v467 = vshrl.u32 %v466, 7
          %v468 = vsub.s32 7, %v467
          %v469 = vrot.slane %v224, %v468
          %v472 = vlaneseq
          %v473 = vshrl.u32 %v472, 7
          %v474 = vsub.s32 3, %v473
          %v475 = vrot.slane %v465, %v474
          %v476 = vlaneseq
          %v477 = vshrl.u32 %v476, 7
          %v478 = vsub.s32 3, %v477
          %v479 = vrot.slane %v469, %v478
          %v480 = vmul.f32 %v448, %v475
          %v481 = vmul.f32 %v448, %v479
          %v482 = vmul.f32 %v452, %v475
          %v483 = vmul.f32 %v452, %v479
          %v484 = vmul.f32 %v456, %v475
          %v485 = vmul.f32 %v456, %v479
          %v486 = vmul.f32 %v460, %v475
          %v487 = vmul.f32 %v460, %v479
          %v488 = vadd.f32 %v438, %v480
          %v489 = vadd.f32 %v439, %v481
          %v490 = vadd.f32 %v440, %v482
          %v491 = vadd.f32 %v441, %v483
          %v492 = vadd.f32 %v442, %v484
          %v493 = vadd.f32 %v443, %v485
          %v494 = vadd.f32 %v444, %v486
          %v495 = vadd.f32 %v445, %v487
          %v496 = vtanh.pop %v488
          %v497 = vtanh.pop %v489
          %v498 = vtanh.pop %v490
          %v499 = vtanh.pop %v491
          %v500 = vtanh.pop %v492
          %v501 = vtanh.pop %v493
          %v502 = vtanh.pop %v494
          %v503 = vtanh.pop %v495
          %504 = vset.pattern.permute.xlu0 2
          %505 = vperm.xlu0 %504, %v200
          %v506 = vpop.permute.xlu0 %505
          %508 = vset.pattern.permute.xlu0 2
          %509 = vperm.xlu0 %508, %v201
          %v510 = vpop.permute.xlu0 %509
          %512 = vset.pattern.permute.xlu0 2
          %513 = vperm.xlu0 %512, %v202
          %v514 = vpop.permute.xlu0 %513
          %516 = vset.pattern.permute.xlu0 2
          %517 = vperm.xlu0 %516, %v203
          %v518 = vpop.permute.xlu0 %517
          %vm520 = vcmask 261120
          %v522 = vsel %vm520, %v205, 0
          %v525 = vsel %vm520, %v206, 0
          %v528 = vsel %vm520, %v207, 0
          %v531 = vsel %vm520, %v208, 0
          %533 = vmatprep.subr.mxu0 %v497
          %534 = vmatpush1.msra.mxu0 %v496
          %535 = vmatprep.subr.mxu0 %v499
          %536 = vmatpush1.msra.mxu0 %v498
          %537 = vmatprep.subr.mxu0 %v501
          %538 = vmatpush1.msra.mxu0 %v500
          %539 = vmatprep.subr.mxu0 %v503
          %540 = vmatpush1.msra.mxu0 %v502
          %541 = vmatprep.subr.mxu0 0.0
          %542 = vmatpush1.msra.mxu0 0.0
          %543 = vmatprep.subr.mxu0 0.0
          %544 = vmatpush1.msra.mxu0 0.0
          %545 = vmatprep.subr.mxu0 0.0
          %546 = vmatpush1.msra.mxu0 0.0
          %547 = vmatprep.subr.mxu0 0.0
          %548 = vmatpush1.msra.mxu0 0.0
          %549 = vmatprep.subr.mxu0 0.0
          %550 = vmatpush1.msra.mxu0 0.0
          %551 = vmatprep.subr.mxu0 0.0
          %552 = vmatpush1.msra.mxu0 0.0
          %553 = vmatprep.subr.mxu0 0.0
          %554 = vmatpush1.msra.mxu0 0.0
          %555 = vmatprep.subr.mxu0 0.0
          %556 = vmatpush1.msra.mxu0 0.0
          %557 = vmatprep.subr.mxu0 0.0
          %558 = vmatpush1.msra.mxu0 0.0
          %559 = vmatprep.subr.mxu0 0.0
          %560 = vmatpush1.msra.mxu0 0.0
          %561 = vmatprep.subr.mxu0 0.0
          %562 = vmatpush1.msra.mxu0 0.0
          %563 = vmatprep.subr.mxu0 0.0
          %564 = vmatpush1.msra.mxu0 0.0
          %565 = vmatprep.subr.mxu0 0.0
          %566 = vmatpush1.msra.mxu0 0.0
          %567 = vmatprep.subr.mxu0 0.0
          %568 = vmatpush1.msra.mxu0 0.0
          %569 = vmatprep.subr.mxu0 0.0
          %570 = vmatpush1.msra.mxu0 0.0
          %571 = vmatprep.subr.mxu0 0.0
          %572 = vmatpush1.msra.mxu0 0.0
          %573 = vmatprep.subr.mxu0 0.0
          %574 = vmatpush1.msra.mxu0 0.0
          %575 = vmatprep.subr.mxu0 0.0
          %576 = vmatpush1.msra.mxu0 0.0
          %577 = vmatprep.subr.mxu0 0.0
          %578 = vmatpush1.msra.mxu0 0.0
          %579 = vmatprep.subr.mxu0 0.0
          %580 = vmatpush1.msra.mxu0 0.0
          %581 = vmatprep.subr.mxu0 0.0
          %582 = vmatpush1.msra.mxu0 0.0
          %583 = vmatprep.subr.mxu0 0.0
          %584 = vmatpush1.msra.mxu0 0.0
          %585 = vmatprep.subr.mxu0 0.0
          %586 = vmatpush1.msra.mxu0 0.0
          %587 = vmatprep.subr.mxu0 0.0
          %588 = vmatpush1.msra.mxu0 0.0
          %589 = vmatprep.subr.mxu0 0.0
          %590 = vmatpush1.msra.mxu0 0.0
          %591 = vmatprep.subr.mxu0 0.0
          %592 = vmatpush1.msra.mxu0 0.0
          %593 = vmatprep.subr.mxu0 0.0
          %594 = vmatpush1.msra.mxu0 0.0
          %595 = vmatprep.subr.mxu0 0.0
          %596 = vmatpush1.msra.mxu0 0.0
          %597 = vmatprep.mubr.f32.mxu0 0.0
          %598 = vmatmul.mubr.f32.gmra.mrb[0].mxu0 %v522
          %v599 = vpop.f32.mrb[0].mxu0
          %v600 = vadd.f32 %v506, %v599
          %v601 = vpop.f32.mrb[0].mxu0
          %v602 = vadd.f32 %v506, %v601
          %603 = vmatprep.mubr.f32.mxu0 0.0
          %604 = vmatmul.mubr.f32.gmra.mrb[0].mxu0 %v525
          %v605 = vpop.f32.mrb[0].mxu0
          %v606 = vadd.f32 %v510, %v605
          %v607 = vpop.f32.mrb[0].mxu0
          %v608 = vadd.f32 %v510, %v607
          %609 = vmatprep.mubr.f32.mxu0 0.0
          %610 = vmatmul.mubr.f32.gmra.mrb[0].mxu0 %v528
          %v611 = vpop.f32.mrb[0].mxu0
          %v612 = vadd.f32 %v514, %v611
          %v613 = vpop.f32.mrb[0].mxu0
          %v614 = vadd.f32 %v514, %v613
          %615 = vmatprep.mubr.f32.mxu0 0.0
          %616 = vmatmul.mubr.f32.gmra.mrb[0].mxu0 %v531
          %v617 = vpop.f32.mrb[0].mxu0
          %v618 = vadd.f32 %v518, %v617
          %v619 = vpop.f32.mrb[0].mxu0
          %v620 = vadd.f32 %v518, %v619
          %621 = vdwg.mxu0
          %v622 = vtanh.pop %v600
          %v623 = vtanh.pop %v602
          %v624 = vtanh.pop %v606
          %v625 = vtanh.pop %v608
          %v626 = vtanh.pop %v612
          %v627 = vtanh.pop %v614
          %v628 = vtanh.pop %v618
          %v629 = vtanh.pop %v620
          %630 = vset.pattern.permute.xlu0 3
          %631 = vperm.xlu0 %630, %v200
          %v632 = vpop.permute.xlu0 %631
          %634 = vset.pattern.permute.xlu0 3
          %635 = vperm.xlu0 %634, %v201
          %v636 = vpop.permute.xlu0 %635
          %638 = vset.pattern.permute.xlu0 3
          %639 = vperm.xlu0 %638, %v202
          %v640 = vpop.permute.xlu0 %639
          %642 = vset.pattern.permute.xlu0 3
          %643 = vperm.xlu0 %642, %v203
          %v644 = vpop.permute.xlu0 %643
          %v646 = vmul.f32 %v622, %v632
          %v647 = vmul.f32 %v623, %v632
          %v648 = vmul.f32 %v624, %v636
          %v649 = vmul.f32 %v625, %v636
          %v650 = vmul.f32 %v626, %v640
          %v651 = vmul.f32 %v627, %v640
          %v652 = vmul.f32 %v628, %v644
          %v653 = vmul.f32 %v629, %v644
          %v654 = vadd.f32 %v646, %v648
          %v655 = vadd.f32 %v654, %v650
          %v656 = vadd.f32 %v655, %v652
          %v657 = vrot.slane %v656, 4
          %v658 = vadd.f32 %v656, %v657
          %v659 = vrot.slane %v658, 2
          %v660 = vadd.f32 %v658, %v659
          %v661 = vrot.slane %v660, 1
          %v662 = vadd.f32 %v660, %v661
          %v663 = vadd.f32 %v647, %v649
          %v664 = vadd.f32 %v663, %v651
          %v665 = vadd.f32 %v664, %v653
          %v666 = vrot.slane %v665, 4
          %v667 = vadd.f32 %v665, %v666
          %v668 = vrot.slane %v667, 2
          %v669 = vadd.f32 %v667, %v668
          %v670 = vrot.slane %v669, 1
          %v671 = vadd.f32 %v669, %v670
          %673 = vset.pattern.permute.xlu0 4
          %674 = vperm.xlu0 %673, %v204
          %v675 = vpop.permute.xlu0 %674
          %v677 = vadd.f32 %v662, %v675
          %v678 = vadd.f32 %v671, %v675
          %v679 = vmul.f32 %v677, %v677
          %v680 = vmul.f32 %v678, %v678
          %v681 = vmul.f32 %v679, %v263
          %v682 = vmul.f32 %v680, %v270
          %v685 = vcombine.low %v681, %v682
          %v687 = vunpack.c.l.s4 1966171168
          %v688 = vunpack.c.0.s8 %v687
          %v689 = vlaneseq
          %v690 = vshrl.u32 %v689, 7
          %v691 = vsub.s32 %v688, %v690
          %v692 = vrot.slane %v685, %v691
          %v694 = vunpack.c.l.s4 1966171168
          %v695 = vunpack.c.0.s8 %v694
          %v696 = vlaneseq
          %v697 = vshrl.u32 %v696, 7
          %v698 = vsub.s32 %v695, %v697
          %v699 = vrot.slane %v692, %v698
          %s701 = scalar_lea.vmem %s191, %s220 [#allocation2]
          %v702 = vlaneseq
          %vm703 = vcmp.ge.s32.totalorder %v702, 0
          %vm704 = vcmp.lt.s32.totalorder %v702, 256
          %vm705 = vmand %vm703, %vm704
          %706 = vst.msk [vmem:[%s701] sm:$0x3] %vm705, %v699
        $region41: #{lyapunov_forward_xt.1} parent=35 // loop_footer
          %s218 = sadd.s32 1, %s214
        $region42: #{lyapunov_forward_xt.1} parent=35 // loop_footer_branch
          %213 = sbr.rel target = $region38
        $region43: #{lyapunov_forward_xt.1} parent=35 // loop_exit
          _
        %s707 = sand.u32 %s115, 1
        %s708 = scalar_lea.sflag [#allocation3], %s707
        %s709 = sand.u32 %s115, 1
        %s710 = smul.addr %s709, 10
        %s711 = scalar_lea.vmem [#allocation2], %s710
        // Predicated region
        $region44: #{lyapunov_forward_xt.1} parent=35 // pred_check
          %p712 = pneg %p125
        $region45: #{lyapunov_forward_xt.1} parent=35 // pred_check_branch
          %714 = sbr.rel (%p712) target = $region47
        $region46: #{lyapunov_forward_xt.1} parent=35 // pred_region
          %s715 = smul.u32 10, %s18
          %s717 = ssub.s32 160, 160
          %718 = vsyncadd %s708, %s717
          %s719 = smul.addr %s715, 16
          %s720 = scalar_lea.hbm %s4, %s719
          %s722 = sshll.u32 %s711, 4
          %s723 = int_to_ptr.vmem [resolvable:$true] %s722
          %725 = dma.vmem_to_hbm [thread:$0]  %s723, 160, %s720, %s708
        $region47: #{lyapunov_forward_xt.1} parent=35 // pred_fallthru
          _
      $region36: #{lyapunov_forward_xt.1} parent=5 // pred_fallthru
        _
      %p726 = scmp.le.s32.totalorder 2, %s13
      // Predicated region
      $region48: #{lyapunov_forward_xt.1} parent=5 // pred_check
        %p727 = pneg %p726
      $region49: #{lyapunov_forward_xt.1} parent=5 // pred_check_branch
        %729 = sbr.rel (%p727) target = $region51
      $region50: #{lyapunov_forward_xt.1} parent=5 // pred_region
        %s730 = ssub.s32 %s13, 2
        // Predicated region
        $region52: #{lyapunov_forward_xt.1} parent=50 // pred_check
          %p731 = pneg %p131
        $region53: #{lyapunov_forward_xt.1} parent=50 // pred_check_branch
          %733 = sbr.rel (%p731) target = $region55
        $region54: #{lyapunov_forward_xt.1} parent=50 // pred_region
          %s734 = sand.u32 %s116, 1
          %s735 = scalar_lea.sflag [#allocation3], %s734
          %s736 = sand.u32 %s116, 1
          %s737 = smul.addr %s736, 10
          %s738 = scalar_lea.vmem [#allocation2], %s737
          %739 = dma.done %s735, 160
        $region55: #{lyapunov_forward_xt.1} parent=50 // pred_fallthru
          _
      $region51: #{lyapunov_forward_xt.1} parent=5 // pred_fallthru
        _
    $region6: #{lyapunov_forward_xt.1} parent=1 // loop_footer
      %s17 = sadd.s32 1, %s13
    $region7: #{lyapunov_forward_xt.1} parent=1 // loop_footer_branch
      %12 = sbr.rel target = $region3
    $region8: #{lyapunov_forward_xt.1} parent=1 // loop_exit
      _
    %740 = vsyncpa [#allocation3], 1
    %s741 = scalar_lea.sflag [#allocation3], 1
    %742 = vsyncpa %s741, 1

</llo_original>
